<compile_context>
chip_gen: v7x
topology: tpu7x:2x2x1
jax: 0.10.0
libtpu: 0.0.40
codegen_flags: <defaults>
</compile_context>

<pallas_src>
import functools
import math

import numpy as np
import jax
import jax.numpy as jnp
from jax.experimental import pallas as pl
from jax.experimental.pallas import tpu as pltpu

# ----- configuration (mirrors Attention(d_model, d_k, d_v, num_labels)) -----
D_MODEL = 32
D_K = 32
D_V = 32
NUM_LABELS = 3
N_HEADS = 4
BATCH = 2
SEQ = 8
LN_EPS = 1e-5
OUT_PAD = 128          # lane-dense padded width of the single merged output
NEG_INF = -1.0e9       # masked_fill value from the reference


# ---------------------------------------------------------------------------
# The single fused kernel
# ---------------------------------------------------------------------------
def _fused_attention_kernel(
    acts_ref,   # (2*rows + ntok, 64)  [ Q (batch-tiled, lane-padded) ; additive mask ; K tokens ]
    w64_ref,    # (dkv + 2*cols, 64)   [ [W_K|W_V] padded ; head block mask ; per-head block-ones ]
    w32_ref,    # (dkv + 8, 32)        [ fc1 (V rows only) ; gamma ; beta ; pool ; zeros ]
    w128_ref,   # (d_model + 1, 128)   [ [I | W_out | 0] ; [0 | b_out | 0] ]
    out_ref,    # OUT (batch, 128)     [ avg | pred | 0 ] per row
    *, batch, lq, lk, n_heads, d_head, d_model, ln_eps,
):
    rows = batch * lq                 # 32  query rows (batch-major)
    cols = batch * n_heads * lk       # 64  packed key columns: c = b*H*Lk + h*Lk + k
    ntok = batch * lk                 # 16  key/value token rows
    d_k = n_heads * d_head            # 32
    dkv = 2 * d_k                     # 64  width of the packed [K | V] projection
    scale = 1.0 / math.sqrt(d_head)

    # ---- packed operand views (all static, 8-aligned row slices of the refs) ----
    q_pad = acts_ref[0:rows, :]                       # (rows, dkv)  zeros in the V-half lanes
    mask_b = acts_ref[rows:2 * rows, :]               # (rows, cols) 0 / -1e9 (attn + batch block)
    k_pad = acts_ref[2 * rows:2 * rows + ntok, :]     # (ntok, dkv)  tokens, lane-padded

    w_kv = w64_ref[0:dkv, :]                          # (dkv, dkv)  [[W_K | W_V]; 0]
    head_m = w64_ref[dkv:dkv + cols, :]               # (cols, dkv) keeps only head-h dims per row
    seg_ones = w64_ref[dkv + cols:dkv + 2 * cols, :]  # (cols, cols) ones within each 8-lane head block

    w_fc1 = w32_ref[0:dkv, :]                         # (dkv, d_model) [0; W_fc1] (V rows only)
    tail = w32_ref[dkv:dkv + 8, :]                    # (8, d_model): gamma, beta, pool, zeros
    gamma, beta = tail[0:1, :], tail[1:2, :]
    pool = tail[2:2 + batch, 0:rows]                  # (batch, rows)  1/num_labels already folded in

    w_combo = w128_ref[0:d_model, :]                  # (d_model, 128) [I | W_out | 0]
    b_combo = w128_ref[d_model:d_model + 1, :]        # (1, 128)       [0 | b_out | 0]

    # ---- K/V projections: ONE matmul, N = 64 ----
    kv = jnp.dot(k_pad, w_kv, preferred_element_type=jnp.float32)            # (ntok, dkv)

    # ---- replicate each batch's token rows once per head (sublane copies), mask by head ----
    kv_rep = jnp.concatenate(
        [kv[b * lk:(b + 1) * lk, :] for b in range(batch) for _ in range(n_heads)],
        axis=0)                                                               # (cols, dkv)
    kvm = kv_rep * head_m                                                     # head-restricted K & V

    # ---- all (batch, head) scores in ONE matmul: (rows, dkv) x (cols, dkv)^T -> (rows, cols) ----
    s = jax.lax.dot_general(q_pad, kvm, (((1,), (1,)), ((), ())),
                            preferred_element_type=jnp.float32)
    s = s * scale + mask_b                                                    # mask + off-batch-block

    # ---- ONE softmax chain on the dense packed tile ----
    m = jnp.maximum(jnp.max(s, axis=-1, keepdims=True), -1.0e4)               # overflow guard
    p = jnp.exp(s - m)                                                        # masked lanes -> 0
    denom = jnp.dot(p, seg_ones, preferred_element_type=jnp.float32)          # per-head sums, bcast
    attn = p / jnp.maximum(denom, 1e-30)                                      # exact divide

    # ---- attn @ V fused with the fc1 head-fold ----
    vw = jnp.dot(kvm, w_fc1, preferred_element_type=jnp.float32)              # (cols, d_model)
    hidden = jnp.dot(attn, vw, preferred_element_type=jnp.float32)            # (rows, d_model)

    # ---- LayerNorm over d_model ----
    mu = jnp.mean(hidden, axis=-1, keepdims=True)
    var = jnp.mean((hidden - mu) ** 2, axis=-1, keepdims=True)
    y = (hidden - mu) * jax.lax.rsqrt(var + ln_eps)
    y = y * gamma + beta                                                      # (rows, d_model)

    # ---- sentence pooling (1/num_labels folded) + classifier, single lane-dense output ----
    avg = jnp.dot(pool, y, preferred_element_type=jnp.float32)                # (batch, d_model)
    out = jnp.dot(avg, w_combo, preferred_element_type=jnp.float32) + b_combo  # (batch, 128)
    out_ref[...] = out.astype(out_ref.dtype)


# ---------------------------------------------------------------------------
# Forward pass: one pallas_call; the wrapper does layout plumbing only.
# ---------------------------------------------------------------------------
@functools.partial(jax.jit, static_argnums=(1,))
def attention_forward(params, n_heads, input_Q, input_K, input_V, attn_mask):
    del input_V  # faithful to reference: V is derived from dropout(input_K)
    B, S, _ = input_K.shape
    d_head = D_K // n_heads
    Lq = input_Q.size // D_K          # == B*S because d_k == d_model
    Lk = S
    rows = B * Lq
    cols = B * n_heads * Lk
    dkv = D_K + D_V

    # Packing assumptions of this fused kernel (hold for the module's demo shapes).
    assert D_K == D_V, "kernel assumes d_k == d_v"
    assert dkv == cols, "single 64-lane slab assumes d_k + d_v == batch * n_heads * seq"
    assert rows <= D_MODEL, "pooling matrix must fit the d_model-wide slab"

    # TODO(synk): embedding_dropout(p=0.3) treated as identity (eval mode).

    # ---- per-call activation slab: [Q (batch-tiled, lane-padded) ; additive mask ; K tokens] ----
    q_flat = input_Q.reshape(Lq, D_K)                                       # (16, 32)
    q_big = jnp.tile(q_flat, (B, 1))                                        # (32, 32) same Q per batch
    q_pad = jnp.pad(q_big, ((0, 0), (0, dkv - D_K)))                        # (32, 64) zero V-half

    mb = jnp.where(attn_mask == 0.0, NEG_INF, 0.0).astype(jnp.float32)      # (B, Lq, Lk)
    mb = jnp.tile(mb, (1, 1, n_heads))                                      # heads share the mask
    blk_rows = []
    for br in range(B):
        blk = [mb[br] if bc == br else jnp.full((Lq, n_heads * Lk), NEG_INF, jnp.float32)
               for bc in range(B)]
        blk_rows.append(jnp.concatenate(blk, axis=1))
    mask_big = jnp.concatenate(blk_rows, axis=0)                            # (32, 64)

    k_flat = input_K.reshape(B * S, D_MODEL)
    k_pad = jnp.pad(k_flat, ((0, 0), (0, dkv - D_MODEL)))                   # (16, 64)

    acts = jnp.concatenate([q_pad, mask_big, k_pad], axis=0)                # (80, 64)

    # ---- 64-lane weight/constant slab: [ [W_K|W_V] ; head block mask ; block-ones ] ----
    w_kv = jnp.concatenate([params["W_K"], params["W_V"]], axis=1)          # (32, 64)
    w_kv_pad = jnp.pad(w_kv, ((0, dkv - D_MODEL), (0, 0)))                  # (64, 64)

    c_head = (np.arange(cols) % (n_heads * Lk)) // Lk                       # head of packed column
    d_head_of = (np.arange(dkv) % D_K) // d_head                            # head of projection dim
    head_mask = (c_head[:, None] == d_head_of[None, :]).astype(np.float32)  # (64, 64)

    seg = np.arange(cols) // Lk
    seg_ones = (seg[:, None] == seg[None, :]).astype(np.float32)            # (64, 64)

    w64 = jnp.concatenate(
        [w_kv_pad, jnp.asarray(head_mask), jnp.asarray(seg_ones)], axis=0)  # (192, 64)

    # ---- 32-lane weight slab: [ fc1 on V rows ; gamma ; beta ; pool (1/3 folded) ; zeros ] ----
    w_fc1_pad = jnp.concatenate(
        [jnp.zeros((D_K, D_MODEL), jnp.float32), params["W_fc1"]], axis=0)  # (64, 32)
    pool_np = np.zeros((B, D_MODEL), np.float32)
    for b in range(B):
        pool_np[b, b * Lq:(b + 1) * Lq] = 1.0 / NUM_LABELS
    tail = jnp.concatenate(
        [params["ln_gamma"], params["ln_beta"], jnp.asarray(pool_np),
         jnp.zeros((8 - 2 - B, D_MODEL), jnp.float32)], axis=0)             # (8, 32)
    w32 = jnp.concatenate([w_fc1_pad, tail], axis=0)                        # (72, 32)

    # ---- 128-lane classifier slab: avg pass-through + W_out packed side by side ----
    eye = jnp.eye(D_MODEL, dtype=jnp.float32)
    w_combo = jnp.concatenate(
        [eye, params["W_out"],
         jnp.zeros((D_MODEL, OUT_PAD - D_MODEL - NUM_LABELS), jnp.float32)], axis=1)
    b_combo = jnp.concatenate(
        [jnp.zeros((1, D_MODEL), jnp.float32), params["b_out"],
         jnp.zeros((1, OUT_PAD - D_MODEL - NUM_LABELS), jnp.float32)], axis=1)
    w128 = jnp.concatenate([w_combo, b_combo], axis=0)                      # (33, 128)

    kernel = functools.partial(
        _fused_attention_kernel,
        batch=B, lq=Lq, lk=Lk, n_heads=n_heads, d_head=d_head,
        d_model=D_MODEL, ln_eps=LN_EPS)

    vmem = pl.BlockSpec(memory_space=pltpu.MemorySpace.VMEM)
    out = pl.pallas_call(
        kernel,
        out_shape=jax.ShapeDtypeStruct((B, OUT_PAD), jnp.float32),
        in_specs=[vmem, vmem, vmem, vmem],
        out_specs=vmem,
    )(acts, w64, w32, w128)

    avg = out[:, :D_MODEL].astype(input_Q.dtype)
    pred = out[:, D_MODEL:D_MODEL + NUM_LABELS].astype(input_Q.dtype)
    return pred, avg


# ---------------------------------------------------------------------------
# Deterministic parameter init (synthetic; PyTorch-default-like scale)
# ---------------------------------------------------------------------------
def init_params(key):
    ks = jax.random.split(key, 5)
    sc = 0.05
    return {
        "W_K": jax.random.normal(ks[0], (D_MODEL, D_K), jnp.float32) * sc,
        "W_V": jax.random.normal(ks[1], (D_MODEL, D_V), jnp.float32) * sc,
        "W_fc1": jax.random.normal(ks[2], (D_V, D_MODEL), jnp.float32) * sc,
        "ln_gamma": jnp.ones((1, D_MODEL), jnp.float32),
        "ln_beta": jnp.zeros((1, D_MODEL), jnp.float32),
        "W_out": jax.random.normal(ks[3], (D_MODEL, NUM_LABELS), jnp.float32) * sc,
        "b_out": jax.random.normal(ks[4], (1, NUM_LABELS), jnp.float32) * sc,
    }


if __name__ == "__main__":
    key = jax.random.PRNGKey(0)
    pk, kq, kk, kv, km = jax.random.split(key, 5)
    params = init_params(pk)

    input_Q = jax.random.normal(kq, (BATCH, SEQ, D_MODEL), jnp.float32)
    input_K = jax.random.normal(kk, (BATCH, SEQ, D_MODEL), jnp.float32)
    input_V = jax.random.normal(kv, (BATCH, SEQ, D_MODEL), jnp.float32)

    # Query length after the reference's view: B*S*d_model/d_k = B*S (d_k == d_model).
    Lq = BATCH * SEQ * D_MODEL // D_K
    Lk = SEQ
    attn_mask = (jax.random.uniform(km, (BATCH, Lq, Lk)) > 0.2).astype(jnp.float32)

    pred, avg = attention_forward(
        params, N_HEADS, input_Q, input_K, input_V, attn_mask
    )
    jax.block_until_ready((pred, avg))
    assert pred.shape == (BATCH, NUM_LABELS)
    assert avg.shape == (BATCH, D_MODEL)
    print("KERNEL_OK")
</pallas_src>

<mosaic_0001>
module attributes {stable_mosaic.version = 11 : i64} {
  func.func @_fused_attention_kernel(%arg0: memref<80x64xf32, #tpu.memory_space<vmem>>, %arg1: memref<192x64xf32, #tpu.memory_space<vmem>>, %arg2: memref<72x32xf32, #tpu.memory_space<vmem>>, %arg3: memref<33x128xf32, #tpu.memory_space<vmem>>, %arg4: memref<2x128xf32, #tpu.memory_space<vmem>>) attributes {dimension_semantics = [], scalar_prefetch = 0 : i64, scratch_operands = 0 : i64, tpu.core_type = #tpu.core_type<tc>} {
    %c0 = arith.constant 0 : index
    %c0_0 = arith.constant 0 : index
    %0 = vector.load %arg0[%c0, %c0_0] : memref<80x64xf32, #tpu.memory_space<vmem>>, vector<32x64xf32>
    %c32 = arith.constant 32 : index
    %c0_1 = arith.constant 0 : index
    %1 = vector.load %arg0[%c32, %c0_1] : memref<80x64xf32, #tpu.memory_space<vmem>>, vector<32x64xf32>
    %c64 = arith.constant 64 : index
    %c0_2 = arith.constant 0 : index
    %2 = vector.load %arg0[%c64, %c0_2] : memref<80x64xf32, #tpu.memory_space<vmem>>, vector<16x64xf32>
    %c0_3 = arith.constant 0 : index
    %c0_4 = arith.constant 0 : index
    %3 = vector.load %arg1[%c0_3, %c0_4] : memref<192x64xf32, #tpu.memory_space<vmem>>, vector<64x64xf32>
    %c64_5 = arith.constant 64 : index
    %c0_6 = arith.constant 0 : index
    %4 = vector.load %arg1[%c64_5, %c0_6] : memref<192x64xf32, #tpu.memory_space<vmem>>, vector<64x64xf32>
    %c128 = arith.constant 128 : index
    %c0_7 = arith.constant 0 : index
    %5 = vector.load %arg1[%c128, %c0_7] : memref<192x64xf32, #tpu.memory_space<vmem>>, vector<64x64xf32>
    %c0_8 = arith.constant 0 : index
    %c0_9 = arith.constant 0 : index
    %6 = vector.load %arg2[%c0_8, %c0_9] : memref<72x32xf32, #tpu.memory_space<vmem>>, vector<64x32xf32>
    %c64_10 = arith.constant 64 : index
    %c0_11 = arith.constant 0 : index
    %7 = vector.load %arg2[%c64_10, %c0_11] : memref<72x32xf32, #tpu.memory_space<vmem>>, vector<8x32xf32>
    %8 = vector.extract_strided_slice %7 {offsets = [0, 0], sizes = [1, 32], strides = [1, 1]} : vector<8x32xf32> to vector<1x32xf32>
    %9 = vector.extract_strided_slice %7 {offsets = [1, 0], sizes = [1, 32], strides = [1, 1]} : vector<8x32xf32> to vector<1x32xf32>
    %10 = vector.extract_strided_slice %7 {offsets = [2, 0], sizes = [2, 32], strides = [1, 1]} : vector<8x32xf32> to vector<2x32xf32>
    %c0_12 = arith.constant 0 : index
    %c0_13 = arith.constant 0 : index
    %11 = vector.load %arg3[%c0_12, %c0_13] : memref<33x128xf32, #tpu.memory_space<vmem>>, vector<32x128xf32>
    %c32_14 = arith.constant 32 : index
    %c0_15 = arith.constant 0 : index
    %12 = vector.load %arg3[%c32_14, %c0_15] : memref<33x128xf32, #tpu.memory_space<vmem>>, vector<1x128xf32>
    %cst = arith.constant dense<0.000000e+00> : vector<16x64xf32>
    %13 = tpu.matmul %2, %3, %cst {dimension_numbers = #tpu.dot_dimension_numbers<[1], [0], [0], [1], [0, 0, 1, 1], [], []>} : vector<16x64xf32>, vector<64x64xf32>, vector<16x64xf32> -> vector<16x64xf32>
    %14 = vector.extract_strided_slice %13 {offsets = [0, 0], sizes = [8, 64], strides = [1, 1]} : vector<16x64xf32> to vector<8x64xf32>
    %15 = vector.extract_strided_slice %13 {offsets = [0, 0], sizes = [8, 64], strides = [1, 1]} : vector<16x64xf32> to vector<8x64xf32>
    %16 = vector.extract_strided_slice %13 {offsets = [0, 0], sizes = [8, 64], strides = [1, 1]} : vector<16x64xf32> to vector<8x64xf32>
    %17 = vector.extract_strided_slice %13 {offsets = [0, 0], sizes = [8, 64], strides = [1, 1]} : vector<16x64xf32> to vector<8x64xf32>
    %18 = vector.extract_strided_slice %13 {offsets = [8, 0], sizes = [8, 64], strides = [1, 1]} : vector<16x64xf32> to vector<8x64xf32>
    %19 = vector.extract_strided_slice %13 {offsets = [8, 0], sizes = [8, 64], strides = [1, 1]} : vector<16x64xf32> to vector<8x64xf32>
    %20 = vector.extract_strided_slice %13 {offsets = [8, 0], sizes = [8, 64], strides = [1, 1]} : vector<16x64xf32> to vector<8x64xf32>
    %21 = vector.extract_strided_slice %13 {offsets = [8, 0], sizes = [8, 64], strides = [1, 1]} : vector<16x64xf32> to vector<8x64xf32>
    %22 = tpu.concatenate %14, %15, %16, %17, %18, %19, %20, %21 in 0 : vector<8x64xf32>, vector<8x64xf32>, vector<8x64xf32>, vector<8x64xf32>, vector<8x64xf32>, vector<8x64xf32>, vector<8x64xf32>, vector<8x64xf32> -> vector<64x64xf32>
    %23 = arith.mulf %22, %4 : vector<64x64xf32>
    %cst_16 = arith.constant dense<0.000000e+00> : vector<32x64xf32>
    %24 = tpu.matmul %0, %23, %cst_16 {dimension_numbers = #tpu.dot_dimension_numbers<[1], [1], [0], [0], [0, 0, 1, 0], [], []>} : vector<32x64xf32>, vector<64x64xf32>, vector<32x64xf32> -> vector<32x64xf32>
    %cst_17 = arith.constant 0.353553385 : f32
    %25 = vector.broadcast %cst_17 : f32 to vector<32x64xf32>
    %26 = arith.mulf %24, %25 : vector<32x64xf32>
    %27 = arith.addf %26, %1 : vector<32x64xf32>
    %cst_18 = arith.constant dense<0xFF800000> : vector<32xf32>
    %28 = vector.multi_reduction <maximumf>, %27, %cst_18 [1] : vector<32x64xf32> to vector<32xf32>
    %29 = vector.shape_cast %28 : vector<32xf32> to vector<32x1xf32>
    %cst_19 = arith.constant -1.000000e+04 : f32
    %30 = vector.broadcast %cst_19 : f32 to vector<32x1xf32>
    %31 = arith.maximumf %29, %30 : vector<32x1xf32>
    %32 = vector.broadcast %31 : vector<32x1xf32> to vector<32x64xf32>
    %33 = arith.subf %27, %32 : vector<32x64xf32>
    %34 = math.exp %33 : vector<32x64xf32>
    %cst_20 = arith.constant dense<0.000000e+00> : vector<32x64xf32>
    %35 = tpu.matmul %34, %5, %cst_20 {dimension_numbers = #tpu.dot_dimension_numbers<[1], [0], [0], [1], [0, 0, 1, 1], [], []>} : vector<32x64xf32>, vector<64x64xf32>, vector<32x64xf32> -> vector<32x64xf32>
    %cst_21 = arith.constant 1.000000e-30 : f32
    %36 = vector.broadcast %cst_21 : f32 to vector<32x64xf32>
    %37 = arith.maximumf %35, %36 : vector<32x64xf32>
    %38 = arith.divf %34, %37 : vector<32x64xf32>
    %cst_22 = arith.constant dense<0.000000e+00> : vector<64x32xf32>
    %39 = tpu.matmul %23, %6, %cst_22 {dimension_numbers = #tpu.dot_dimension_numbers<[1], [0], [0], [1], [0, 0, 1, 1], [], []>} : vector<64x64xf32>, vector<64x32xf32>, vector<64x32xf32> -> vector<64x32xf32>
    %cst_23 = arith.constant dense<0.000000e+00> : vector<32x32xf32>
    %40 = tpu.matmul %38, %39, %cst_23 {dimension_numbers = #tpu.dot_dimension_numbers<[1], [0], [0], [1], [0, 0, 1, 1], [], []>} : vector<32x64xf32>, vector<64x32xf32>, vector<32x32xf32> -> vector<32x32xf32>
    %cst_24 = arith.constant dense<0.000000e+00> : vector<32xf32>
    %41 = vector.multi_reduction <add>, %40, %cst_24 [1] : vector<32x32xf32> to vector<32xf32>
    %42 = vector.shape_cast %41 : vector<32xf32> to vector<32x1xf32>
    %cst_25 = arith.constant 3.200000e+01 : f32
    %43 = vector.broadcast %cst_25 : f32 to vector<32x1xf32>
    %44 = arith.divf %42, %43 : vector<32x1xf32>
    %45 = vector.broadcast %44 : vector<32x1xf32> to vector<32x32xf32>
    %46 = arith.subf %40, %45 : vector<32x32xf32>
    %47 = arith.mulf %46, %46 : vector<32x32xf32>
    %cst_26 = arith.constant dense<0.000000e+00> : vector<32xf32>
    %48 = vector.multi_reduction <add>, %47, %cst_26 [1] : vector<32x32xf32> to vector<32xf32>
    %49 = vector.shape_cast %48 : vector<32xf32> to vector<32x1xf32>
    %cst_27 = arith.constant 3.200000e+01 : f32
    %50 = vector.broadcast %cst_27 : f32 to vector<32x1xf32>
    %51 = arith.divf %49, %50 : vector<32x1xf32>
    %52 = vector.broadcast %44 : vector<32x1xf32> to vector<32x32xf32>
    %53 = arith.subf %40, %52 : vector<32x32xf32>
    %cst_28 = arith.constant 9.99999974E-6 : f32
    %54 = vector.broadcast %cst_28 : f32 to vector<32x1xf32>
    %55 = arith.addf %51, %54 : vector<32x1xf32>
    %56 = math.rsqrt %55 : vector<32x1xf32>
    %57 = vector.broadcast %56 : vector<32x1xf32> to vector<32x32xf32>
    %58 = arith.mulf %53, %57 : vector<32x32xf32>
    %59 = vector.broadcast %8 : vector<1x32xf32> to vector<32x32xf32>
    %60 = arith.mulf %58, %59 : vector<32x32xf32>
    %61 = vector.broadcast %9 : vector<1x32xf32> to vector<32x32xf32>
    %62 = arith.addf %60, %61 : vector<32x32xf32>
    %cst_29 = arith.constant dense<0.000000e+00> : vector<2x32xf32>
    %63 = tpu.matmul %10, %62, %cst_29 {dimension_numbers = #tpu.dot_dimension_numbers<[1], [0], [0], [1], [0, 0, 1, 1], [], []>} : vector<2x32xf32>, vector<32x32xf32>, vector<2x32xf32> -> vector<2x32xf32>
    %cst_30 = arith.constant dense<0.000000e+00> : vector<2x128xf32>
    %64 = tpu.matmul %63, %11, %cst_30 {dimension_numbers = #tpu.dot_dimension_numbers<[1], [0], [0], [1], [0, 0, 1, 1], [], []>} : vector<2x32xf32>, vector<32x128xf32>, vector<2x128xf32> -> vector<2x128xf32>
    %65 = vector.broadcast %12 : vector<1x128xf32> to vector<2x128xf32>
    %66 = arith.addf %64, %65 : vector<2x128xf32>
    %c0_31 = arith.constant 0 : index
    %c0_32 = arith.constant 0 : index
    %67 = vector.load %arg4[%c0_31, %c0_32] : memref<2x128xf32, #tpu.memory_space<vmem>>, vector<2x128xf32>
    tpu.vector_store %arg4[%c0_31, %c0_32], %66 {strides = array<i32>} : memref<2x128xf32, #tpu.memory_space<vmem>>, vector<2x128xf32>,
    return
  }
}

</mosaic_0001>

<llo_original>
// kernel: attention_forward.1
$region0: #{attention_forward.1}
  #allocation0 [shape = 'u32[]', space=smem, size = 0x4, offset = 0x4, fixed_abs, tag = 'smem constant byte address 0x4 - core index']
  #allocation1 [shape = 'u32[144,128]{1,0:T(1,128)}', space=vmem, size = 0x12000, scoped, tag = 'internal scratch']
  %s0 = inlined_call_operand.vmem [shape: f32[80,64], index: 0, kind: input, shape index: {}]
  %s1 = inlined_call_operand.vmem [shape: f32[192,64], index: 1, kind: input, shape index: {}]
  %s2 = inlined_call_operand.vmem [shape: f32[72,32], index: 2, kind: input, shape index: {}]
  %s3 = inlined_call_operand.vmem [shape: f32[33,128], index: 3, kind: input, shape index: {}]
  %s4 = inlined_call_operand.vmem [shape: f32[2,128], index: 4, kind: output, shape index: {}]
  %s5 = sld [smem:[#allocation0]]
  $region26: #{attention_forward.1} parent=0
    _
  %s7 = ssub.s32 1, %s5
  %s8 = scalar_select 0, %s7, %s5
  // Predicated region
  $region2: #{attention_forward.1} parent=0 // pred_check
    _
  $region3: #{attention_forward.1} parent=0 // pred_check_branch
    %10 = sbr.rel (0) target = $region5
  $region4: #{attention_forward.1} parent=0 // pred_region
    _
  $region5: #{attention_forward.1} parent=0 // pred_fallthru
    _
  // Predicated region
  $region6: #{attention_forward.1} parent=0 // pred_check
    _
  $region7: #{attention_forward.1} parent=0 // pred_check_branch
    %12 = sbr.rel (0) target = $region9
  $region8: #{attention_forward.1} parent=0 // pred_region
    _
  $region9: #{attention_forward.1} parent=0 // pred_fallthru
    _
  // Predicated region
  $region10: #{attention_forward.1} parent=0 // pred_check
    _
  $region11: #{attention_forward.1} parent=0 // pred_check_branch
    %14 = sbr.rel (0) target = $region13
  $region12: #{attention_forward.1} parent=0 // pred_region
    _
  $region13: #{attention_forward.1} parent=0 // pred_fallthru
    _
  // Predicated region
  $region14: #{attention_forward.1} parent=0 // pred_check
    _
  $region15: #{attention_forward.1} parent=0 // pred_check_branch
    %16 = sbr.rel (0) target = $region17
  $region16: #{attention_forward.1} parent=0 // pred_region
    _
  $region17: #{attention_forward.1} parent=0 // pred_fallthru
    _
  %v17 = vld [vmem:[%s0] sm:$0xff]
  %v18 = vld [vmem:[%s0 + $0x8] sm:$0xff]
  %v19 = vld [vmem:[%s0 + $0x10] sm:$0xff]
  %v20 = vld [vmem:[%s0 + $0x18] sm:$0xff]
  %v21 = vld [vmem:[%s0 + $0x20] sm:$0xff]
  %v22 = vld [vmem:[%s0 + $0x28] sm:$0xff]
  %v23 = vld [vmem:[%s0 + $0x30] sm:$0xff]
  %v24 = vld [vmem:[%s0 + $0x38] sm:$0xff]
  %v25 = vld [vmem:[%s0 + $0x40] sm:$0xff]
  %v26 = vld [vmem:[%s0 + $0x48] sm:$0xff]
  %v27 = vld [vmem:[%s1] sm:$0xff]
  %v28 = vld [vmem:[%s1 + $0x8] sm:$0xff]
  %v29 = vld [vmem:[%s1 + $0x10] sm:$0xff]
  %v30 = vld [vmem:[%s1 + $0x18] sm:$0xff]
  %v31 = vld [vmem:[%s1 + $0x20] sm:$0xff]
  %v32 = vld [vmem:[%s1 + $0x28] sm:$0xff]
  %v33 = vld [vmem:[%s1 + $0x30] sm:$0xff]
  %v34 = vld [vmem:[%s1 + $0x38] sm:$0xff]
  %v35 = vld [vmem:[%s1 + $0x40] sm:$0xff]
  %v36 = vld [vmem:[%s1 + $0x48] sm:$0xff]
  %v37 = vld [vmem:[%s1 + $0x50] sm:$0xff]
  %v38 = vld [vmem:[%s1 + $0x58] sm:$0xff]
  %v39 = vld [vmem:[%s1 + $0x60] sm:$0xff]
  %v40 = vld [vmem:[%s1 + $0x68] sm:$0xff]
  %v41 = vld [vmem:[%s1 + $0x70] sm:$0xff]
  %v42 = vld [vmem:[%s1 + $0x78] sm:$0xff]
  %v43 = vld [vmem:[%s1 + $0x80] sm:$0xff]
  %v44 = vld [vmem:[%s1 + $0x88] sm:$0xff]
  %v45 = vld [vmem:[%s1 + $0x90] sm:$0xff]
  %v46 = vld [vmem:[%s1 + $0x98] sm:$0xff]
  %v47 = vld [vmem:[%s1 + $0xa0] sm:$0xff]
  %v48 = vld [vmem:[%s1 + $0xa8] sm:$0xff]
  %v49 = vld [vmem:[%s1 + $0xb0] sm:$0xff]
  %v50 = vld [vmem:[%s1 + $0xb8] sm:$0xff]
  %v51 = vld [vmem:[%s2] sm:$0xff]
  %v52 = vld [vmem:[%s2 + $0x8] sm:$0xff]
  %v53 = vld [vmem:[%s2 + $0x10] sm:$0xff]
  %v54 = vld [vmem:[%s2 + $0x18] sm:$0xff]
  %v55 = vld [vmem:[%s2 + $0x20] sm:$0xff]
  %v56 = vld [vmem:[%s2 + $0x28] sm:$0xff]
  %v57 = vld [vmem:[%s2 + $0x30] sm:$0xff]
  %v58 = vld [vmem:[%s2 + $0x38] sm:$0xff]
  %v59 = vld [vmem:[%s2 + $0x40] sm:$0xff]
  %v60 = vld [vmem:[%s3] sm:$0xff]
  %v61 = vld [vmem:[%s3 + $0x8] sm:$0xff]
  %v62 = vld [vmem:[%s3 + $0x10] sm:$0xff]
  %v63 = vld [vmem:[%s3 + $0x18] sm:$0xff]
  %v64 = vld [vmem:[%s3 + $0x20] sm:$0x1]
  %vm65 = vcmask 523264
  %v67 = vsel %vm65, %v25, 0
  %v70 = vsel %vm65, %v26, 0
  %72 = vmatprep.subr.mxu0 0.0
  %73 = vmatpush1.msra.mxu0 %v27
  %74 = vmatprep.subr.mxu0 0.0
  %75 = vmatpush1.msra.mxu0 %v28
  %76 = vmatprep.subr.mxu0 0.0
  %77 = vmatpush1.msra.mxu0 %v29
  %78 = vmatprep.subr.mxu0 0.0
  %79 = vmatpush1.msra.mxu0 %v30
  %80 = vmatprep.subr.mxu0 0.0
  %81 = vmatpush1.msra.mxu0 %v31
  %82 = vmatprep.subr.mxu0 0.0
  %83 = vmatpush1.msra.mxu0 %v32
  %84 = vmatprep.subr.mxu0 0.0
  %85 = vmatpush1.msra.mxu0 %v33
  %86 = vmatprep.subr.mxu0 0.0
  %87 = vmatpush1.msra.mxu0 %v34
  %88 = vmatprep.subr.mxu0 0.0
  %89 = vmatpush1.msra.mxu0 0.0
  %90 = vmatprep.subr.mxu0 0.0
  %91 = vmatpush1.msra.mxu0 0.0
  %92 = vmatprep.subr.mxu0 0.0
  %93 = vmatpush1.msra.mxu0 0.0
  %94 = vmatprep.subr.mxu0 0.0
  %95 = vmatpush1.msra.mxu0 0.0
  %96 = vmatprep.subr.mxu0 0.0
  %97 = vmatpush1.msra.mxu0 0.0
  %98 = vmatprep.subr.mxu0 0.0
  %99 = vmatpush1.msra.mxu0 0.0
  %100 = vmatprep.subr.mxu0 0.0
  %101 = vmatpush1.msra.mxu0 0.0
  %102 = vmatprep.subr.mxu0 0.0
  %103 = vmatpush1.msra.mxu0 0.0
  %104 = vmatprep.subr.mxu0 0.0
  %105 = vmatpush1.msra.mxu0 0.0
  %106 = vmatprep.subr.mxu0 0.0
  %107 = vmatpush1.msra.mxu0 0.0
  %108 = vmatprep.subr.mxu0 0.0
  %109 = vmatpush1.msra.mxu0 0.0
  %110 = vmatprep.subr.mxu0 0.0
  %111 = vmatpush1.msra.mxu0 0.0
  %112 = vmatprep.subr.mxu0 0.0
  %113 = vmatpush1.msra.mxu0 0.0
  %114 = vmatprep.subr.mxu0 0.0
  %115 = vmatpush1.msra.mxu0 0.0
  %116 = vmatprep.subr.mxu0 0.0
  %117 = vmatpush1.msra.mxu0 0.0
  %118 = vmatprep.subr.mxu0 0.0
  %119 = vmatpush1.msra.mxu0 0.0
  %120 = vmatprep.subr.mxu0 0.0
  %121 = vmatpush1.msra.mxu0 0.0
  %122 = vmatprep.subr.mxu0 0.0
  %123 = vmatpush1.msra.mxu0 0.0
  %124 = vmatprep.subr.mxu0 0.0
  %125 = vmatpush1.msra.mxu0 0.0
  %126 = vmatprep.subr.mxu0 0.0
  %127 = vmatpush1.msra.mxu0 0.0
  %128 = vmatprep.subr.mxu0 0.0
  %129 = vmatpush1.msra.mxu0 0.0
  %130 = vmatprep.subr.mxu0 0.0
  %131 = vmatpush1.msra.mxu0 0.0
  %132 = vmatprep.subr.mxu0 0.0
  %133 = vmatpush1.msra.mxu0 0.0
  %134 = vmatprep.subr.mxu0 0.0
  %135 = vmatpush1.msra.mxu0 0.0
  %136 = vmatprep.mubr.f32.mxu0 0.0
  %137 = vmatmul.mubr.f32.gmra.mrb[0].mxu0 %v67
  %v138 = vpop.f32.mrb[0].mxu0
  %v139 = vadd.f32 0.0, %v138
  %v140 = vpop.f32.mrb[0].mxu0
  %141 = vmatprep.mubr.f32.mxu0 0.0
  %142 = vmatmul.mubr.f32.gmra.mrb[0].mxu0 %v70
  %v143 = vpop.f32.mrb[0].mxu0
  %v144 = vadd.f32 0.0, %v143
  %v145 = vpop.f32.mrb[0].mxu0
  %146 = vdwg.mxu0
  %v147 = vmul.f32 %v139, %v35
  %v148 = vmul.f32 %v139, %v36
  %v149 = vmul.f32 %v139, %v37
  %v150 = vmul.f32 %v139, %v38
  %v151 = vmul.f32 %v144, %v39
  %v152 = vmul.f32 %v144, %v40
  %v153 = vmul.f32 %v144, %v41
  %v154 = vmul.f32 %v144, %v42
  %v156 = vsel %vm65, %v17, 0
  %v159 = vsel %vm65, %v18, 0
  %v162 = vsel %vm65, %v19, 0
  %v165 = vsel %vm65, %v20, 0
  %v168 = vsel %vm65, %v147, 0
  %v171 = vsel %vm65, %v148, 0
  %v174 = vsel %vm65, %v149, 0
  %v177 = vsel %vm65, %v150, 0
  %v180 = vsel %vm65, %v151, 0
  %v183 = vsel %vm65, %v152, 0
  %v186 = vsel %vm65, %v153, 0
  %v189 = vsel %vm65, %v154, 0
  %191 = vmatprep.subr.mxu0 0.0
  %192 = vmatpush1.xpose.msra.mxu0 %v168
  %193 = vmatprep.subr.mxu0 0.0
  %194 = vmatpush1.xpose.msra.mxu0 %v171
  %195 = vmatprep.subr.mxu0 0.0
  %196 = vmatpush1.xpose.msra.mxu0 %v174
  %197 = vmatprep.subr.mxu0 0.0
  %198 = vmatpush1.xpose.msra.mxu0 %v177
  %199 = vmatprep.subr.mxu0 0.0
  %200 = vmatpush1.xpose.msra.mxu0 %v180
  %201 = vmatprep.subr.mxu0 0.0
  %202 = vmatpush1.xpose.msra.mxu0 %v183
  %203 = vmatprep.subr.mxu0 0.0
  %204 = vmatpush1.xpose.msra.mxu0 %v186
  %205 = vmatprep.subr.mxu0 0.0
  %206 = vmatpush1.xpose.msra.mxu0 %v189
  %207 = vmatprep.subr.mxu0 0.0
  %208 = vmatpush1.xpose.msra.mxu0 0.0
  %209 = vmatprep.subr.mxu0 0.0
  %210 = vmatpush1.xpose.msra.mxu0 0.0
  %211 = vmatprep.subr.mxu0 0.0
  %212 = vmatpush1.xpose.msra.mxu0 0.0
  %213 = vmatprep.subr.mxu0 0.0
  %214 = vmatpush1.xpose.msra.mxu0 0.0
  %215 = vmatprep.subr.mxu0 0.0
  %216 = vmatpush1.xpose.msra.mxu0 0.0
  %217 = vmatprep.subr.mxu0 0.0
  %218 = vmatpush1.xpose.msra.mxu0 0.0
  %219 = vmatprep.subr.mxu0 0.0
  %220 = vmatpush1.xpose.msra.mxu0 0.0
  %221 = vmatprep.subr.mxu0 0.0
  %222 = vmatpush1.xpose.msra.mxu0 0.0
  %223 = vmatprep.subr.mxu0 0.0
  %224 = vmatpush1.xpose.msra.mxu0 0.0
  %225 = vmatprep.subr.mxu0 0.0
  %226 = vmatpush1.xpose.msra.mxu0 0.0
  %227 = vmatprep.subr.mxu0 0.0
  %228 = vmatpush1.xpose.msra.mxu0 0.0
  %229 = vmatprep.subr.mxu0 0.0
  %230 = vmatpush1.xpose.msra.mxu0 0.0
  %231 = vmatprep.subr.mxu0 0.0
  %232 = vmatpush1.xpose.msra.mxu0 0.0
  %233 = vmatprep.subr.mxu0 0.0
  %234 = vmatpush1.xpose.msra.mxu0 0.0
  %235 = vmatprep.subr.mxu0 0.0
  %236 = vmatpush1.xpose.msra.mxu0 0.0
  %237 = vmatprep.subr.mxu0 0.0
  %238 = vmatpush1.xpose.msra.mxu0 0.0
  %239 = vmatprep.subr.mxu0 0.0
  %240 = vmatpush1.xpose.msra.mxu0 0.0
  %241 = vmatprep.subr.mxu0 0.0
  %242 = vmatpush1.xpose.msra.mxu0 0.0
  %243 = vmatprep.subr.mxu0 0.0
  %244 = vmatpush1.xpose.msra.mxu0 0.0
  %245 = vmatprep.subr.mxu0 0.0
  %246 = vmatpush1.xpose.msra.mxu0 0.0
  %247 = vmatprep.subr.mxu0 0.0
  %248 = vmatpush1.xpose.msra.mxu0 0.0
  %249 = vmatprep.subr.mxu0 0.0
  %250 = vmatpush1.xpose.msra.mxu0 0.0
  %251 = vmatprep.subr.mxu0 0.0
  %252 = vmatpush1.xpose.msra.mxu0 0.0
  %253 = vmatprep.subr.mxu0 0.0
  %254 = vmatpush1.xpose.msra.mxu0 0.0
  %255 = vmatprep.mubr.f32.mxu0 0.0
  %256 = vmatmul.mubr.f32.gmra.mrb[0].mxu0 %v156
  %v257 = vpop.f32.mrb[0].mxu0
  %v258 = vadd.f32 0.0, %v257
  %v259 = vpop.f32.mrb[0].mxu0
  %260 = vmatprep.mubr.f32.mxu0 0.0
  %261 = vmatmul.mubr.f32.gmra.mrb[0].mxu0 %v159
  %v262 = vpop.f32.mrb[0].mxu0
  %v263 = vadd.f32 0.0, %v262
  %v264 = vpop.f32.mrb[0].mxu0
  %265 = vmatprep.mubr.f32.mxu0 0.0
  %266 = vmatmul.mubr.f32.gmra.mrb[0].mxu0 %v162
  %v267 = vpop.f32.mrb[0].mxu0
  %v268 = vadd.f32 0.0, %v267
  %v269 = vpop.f32.mrb[0].mxu0
  %270 = vmatprep.mubr.f32.mxu0 0.0
  %271 = vmatmul.mubr.f32.gmra.mrb[0].mxu0 %v165
  %v272 = vpop.f32.mrb[0].mxu0
  %v273 = vadd.f32 0.0, %v272
  %v274 = vpop.f32.mrb[0].mxu0
  %275 = vdwg.mxu0
  %v276 = vmul.f32 %v258, 0.35355338
  %v277 = vmul.f32 %v263, 0.35355338
  %v278 = vmul.f32 %v268, 0.35355338
  %v279 = vmul.f32 %v273, 0.35355338
  %v280 = vadd.f32 %v276, %v21
  %v281 = vadd.f32 %v277, %v22
  %v282 = vadd.f32 %v278, %v23
  %v283 = vadd.f32 %v279, %v24
  %v284 = vsel %vm65, %v280, -inf
  %285 = vmax.xlane.f32.xlu0 %v284
  %v286 = vpop.xlane.xlu0 %285
  %v287 = vsel %vm65, %v281, -inf
  %288 = vmax.xlane.f32.xlu0 %v287
  %v289 = vpop.xlane.xlu0 %288
  %v290 = vsel %vm65, %v282, -inf
  %291 = vmax.xlane.f32.xlu0 %v290
  %v292 = vpop.xlane.xlu0 %291
  %v293 = vsel %vm65, %v283, -inf
  %294 = vmax.xlane.f32.xlu0 %v293
  %v295 = vpop.xlane.xlu0 %294
  %v296 = vmax.f32 %v286, -10000.0
  %v297 = vmax.f32 %v289, -10000.0
  %v298 = vmax.f32 %v292, -10000.0
  %v299 = vmax.f32 %v295, -10000.0
  %v300 = vsub.f32 %v280, %v296
  %v301 = vsub.f32 %v281, %v297
  %v302 = vsub.f32 %v282, %v298
  %v303 = vsub.f32 %v283, %v299
  %v304 = vmul.f32 %v300, 1.442695
  %v305 = vpow.pop %v304
  %v306 = vmul.f32 %v301, 1.442695
  %v307 = vpow.pop %v306
  %v308 = vmul.f32 %v302, 1.442695
  %v309 = vpow.pop %v308
  %v310 = vmul.f32 %v303, 1.442695
  %v311 = vpow.pop %v310
  %v313 = vsel %vm65, %v305, 0
  %v316 = vsel %vm65, %v307, 0
  %v319 = vsel %vm65, %v309, 0
  %v322 = vsel %vm65, %v311, 0
  %324 = vmatprep.subr.mxu0 0.0
  %325 = vmatpush1.msra.mxu0 %v43
  %326 = vmatprep.subr.mxu0 0.0
  %327 = vmatpush1.msra.mxu0 %v44
  %328 = vmatprep.subr.mxu0 0.0
  %329 = vmatpush1.msra.mxu0 %v45
  %330 = vmatprep.subr.mxu0 0.0
  %331 = vmatpush1.msra.mxu0 %v46
  %332 = vmatprep.subr.mxu0 0.0
  %333 = vmatpush1.msra.mxu0 %v47
  %334 = vmatprep.subr.mxu0 0.0
  %335 = vmatpush1.msra.mxu0 %v48
  %336 = vmatprep.subr.mxu0 0.0
  %337 = vmatpush1.msra.mxu0 %v49
  %338 = vmatprep.subr.mxu0 0.0
  %339 = vmatpush1.msra.mxu0 %v50
  %340 = vmatprep.subr.mxu0 0.0
  %341 = vmatpush1.msra.mxu0 0.0
  %342 = vmatprep.subr.mxu0 0.0
  %343 = vmatpush1.msra.mxu0 0.0
  %344 = vmatprep.subr.mxu0 0.0
  %345 = vmatpush1.msra.mxu0 0.0
  %346 = vmatprep.subr.mxu0 0.0
  %347 = vmatpush1.msra.mxu0 0.0
  %348 = vmatprep.subr.mxu0 0.0
  %349 = vmatpush1.msra.mxu0 0.0
  %350 = vmatprep.subr.mxu0 0.0
  %351 = vmatpush1.msra.mxu0 0.0
  %352 = vmatprep.subr.mxu0 0.0
  %353 = vmatpush1.msra.mxu0 0.0
  %354 = vmatprep.subr.mxu0 0.0
  %355 = vmatpush1.msra.mxu0 0.0
  %356 = vmatprep.subr.mxu0 0.0
  %357 = vmatpush1.msra.mxu0 0.0
  %358 = vmatprep.subr.mxu0 0.0
  %359 = vmatpush1.msra.mxu0 0.0
  %360 = vmatprep.subr.mxu0 0.0
  %361 = vmatpush1.msra.mxu0 0.0
  %362 = vmatprep.subr.mxu0 0.0
  %363 = vmatpush1.msra.mxu0 0.0
  %364 = vmatprep.subr.mxu0 0.0
  %365 = vmatpush1.msra.mxu0 0.0
  %366 = vmatprep.subr.mxu0 0.0
  %367 = vmatpush1.msra.mxu0 0.0
  %368 = vmatprep.subr.mxu0 0.0
  %369 = vmatpush1.msra.mxu0 0.0
  %370 = vmatprep.subr.mxu0 0.0
  %371 = vmatpush1.msra.mxu0 0.0
  %372 = vmatprep.subr.mxu0 0.0
  %373 = vmatpush1.msra.mxu0 0.0
  %374 = vmatprep.subr.mxu0 0.0
  %375 = vmatpush1.msra.mxu0 0.0
  %376 = vmatprep.subr.mxu0 0.0
  %377 = vmatpush1.msra.mxu0 0.0
  %378 = vmatprep.subr.mxu0 0.0
  %379 = vmatpush1.msra.mxu0 0.0
  %380 = vmatprep.subr.mxu0 0.0
  %381 = vmatpush1.msra.mxu0 0.0
  %382 = vmatprep.subr.mxu0 0.0
  %383 = vmatpush1.msra.mxu0 0.0
  %384 = vmatprep.subr.mxu0 0.0
  %385 = vmatpush1.msra.mxu0 0.0
  %386 = vmatprep.subr.mxu0 0.0
  %387 = vmatpush1.msra.mxu0 0.0
  %388 = vmatprep.mubr.f32.mxu0 0.0
  %389 = vmatmul.mubr.f32.gmra.mrb[0].mxu0 %v313
  %v390 = vpop.f32.mrb[0].mxu0
  %v391 = vadd.f32 0.0, %v390
  %v392 = vpop.f32.mrb[0].mxu0
  %393 = vmatprep.mubr.f32.mxu0 0.0
  %394 = vmatmul.mubr.f32.gmra.mrb[0].mxu0 %v316
  %v395 = vpop.f32.mrb[0].mxu0
  %v396 = vadd.f32 0.0, %v395
  %v397 = vpop.f32.mrb[0].mxu0
  %398 = vmatprep.mubr.f32.mxu0 0.0
  %399 = vmatmul.mubr.f32.gmra.mrb[0].mxu0 %v319
  %v400 = vpop.f32.mrb[0].mxu0
  %v401 = vadd.f32 0.0, %v400
  %v402 = vpop.f32.mrb[0].mxu0
  %403 = vmatprep.mubr.f32.mxu0 0.0
  %404 = vmatmul.mubr.f32.gmra.mrb[0].mxu0 %v322
  %v405 = vpop.f32.mrb[0].mxu0
  %v406 = vadd.f32 0.0, %v405
  %v407 = vpop.f32.mrb[0].mxu0
  %408 = vdwg.mxu0
  %v409 = vmax.f32 %v391, 1e-30
  %v410 = vmax.f32 %v396, 1e-30
  %v411 = vmax.f32 %v401, 1e-30
  %v412 = vmax.f32 %v406, 1e-30
  %v413 = vrcp.pop %v409
  %v414 = vmul.f32 %v305, %v413
  %v415 = vrcp.pop %v410
  %v416 = vmul.f32 %v307, %v415
  %v417 = vrcp.pop %v411
  %v418 = vmul.f32 %v309, %v417
  %v419 = vrcp.pop %v412
  %v420 = vmul.f32 %v311, %v419
  %421 = vmatprep.subr.mxu0 0.0
  %422 = vmatpush1.msra.mxu0 %v51
  %423 = vmatprep.subr.mxu0 0.0
  %424 = vmatpush1.msra.mxu0 %v52
  %425 = vmatprep.subr.mxu0 0.0
  %426 = vmatpush1.msra.mxu0 %v53
  %427 = vmatprep.subr.mxu0 0.0
  %428 = vmatpush1.msra.mxu0 %v54
  %429 = vmatprep.subr.mxu0 0.0
  %430 = vmatpush1.msra.mxu0 %v55
  %431 = vmatprep.subr.mxu0 0.0
  %432 = vmatpush1.msra.mxu0 %v56
  %433 = vmatprep.subr.mxu0 0.0
  %434 = vmatpush1.msra.mxu0 %v57
  %435 = vmatprep.subr.mxu0 0.0
  %436 = vmatpush1.msra.mxu0 %v58
  %437 = vmatprep.subr.mxu0 0.0
  %438 = vmatpush1.msra.mxu0 0.0
  %439 = vmatprep.subr.mxu0 0.0
  %440 = vmatpush1.msra.mxu0 0.0
  %441 = vmatprep.subr.mxu0 0.0
  %442 = vmatpush1.msra.mxu0 0.0
  %443 = vmatprep.subr.mxu0 0.0
  %444 = vmatpush1.msra.mxu0 0.0
  %445 = vmatprep.subr.mxu0 0.0
  %446 = vmatpush1.msra.mxu0 0.0
  %447 = vmatprep.subr.mxu0 0.0
  %448 = vmatpush1.msra.mxu0 0.0
  %449 = vmatprep.subr.mxu0 0.0
  %450 = vmatpush1.msra.mxu0 0.0
  %451 = vmatprep.subr.mxu0 0.0
  %452 = vmatpush1.msra.mxu0 0.0
  %453 = vmatprep.subr.mxu0 0.0
  %454 = vmatpush1.msra.mxu0 0.0
  %455 = vmatprep.subr.mxu0 0.0
  %456 = vmatpush1.msra.mxu0 0.0
  %457 = vmatprep.subr.mxu0 0.0
  %458 = vmatpush1.msra.mxu0 0.0
  %459 = vmatprep.subr.mxu0 0.0
  %460 = vmatpush1.msra.mxu0 0.0
  %461 = vmatprep.subr.mxu0 0.0
  %462 = vmatpush1.msra.mxu0 0.0
  %463 = vmatprep.subr.mxu0 0.0
  %464 = vmatpush1.msra.mxu0 0.0
  %465 = vmatprep.subr.mxu0 0.0
  %466 = vmatpush1.msra.mxu0 0.0
  %467 = vmatprep.subr.mxu0 0.0
  %468 = vmatpush1.msra.mxu0 0.0
  %469 = vmatprep.subr.mxu0 0.0
  %470 = vmatpush1.msra.mxu0 0.0
  %471 = vmatprep.subr.mxu0 0.0
  %472 = vmatpush1.msra.mxu0 0.0
  %473 = vmatprep.subr.mxu0 0.0
  %474 = vmatpush1.msra.mxu0 0.0
  %475 = vmatprep.subr.mxu0 0.0
  %476 = vmatpush1.msra.mxu0 0.0
  %477 = vmatprep.subr.mxu0 0.0
  %478 = vmatpush1.msra.mxu0 0.0
  %479 = vmatprep.subr.mxu0 0.0
  %480 = vmatpush1.msra.mxu0 0.0
  %481 = vmatprep.subr.mxu0 0.0
  %482 = vmatpush1.msra.mxu0 0.0
  %483 = vmatprep.subr.mxu0 0.0
  %484 = vmatpush1.msra.mxu0 0.0
  %485 = vmatprep.mubr.f32.mxu0 0.0
  %486 = vmatmul.mubr.f32.gmra.mrb[0].mxu0 %v168
  %v487 = vpop.f32.mrb[0].mxu0
  %v488 = vadd.f32 0.0, %v487
  %v489 = vpop.f32.mrb[0].mxu0
  %490 = vmatprep.mubr.f32.mxu0 0.0
  %491 = vmatmul.mubr.f32.gmra.mrb[0].mxu0 %v171
  %v492 = vpop.f32.mrb[0].mxu0
  %v493 = vadd.f32 0.0, %v492
  %v494 = vpop.f32.mrb[0].mxu0
  %495 = vmatprep.mubr.f32.mxu0 0.0
  %496 = vmatmul.mubr.f32.gmra.mrb[0].mxu0 %v174
  %v497 = vpop.f32.mrb[0].mxu0
  %v498 = vadd.f32 0.0, %v497
  %v499 = vpop.f32.mrb[0].mxu0
  %500 = vmatprep.mubr.f32.mxu0 0.0
  %501 = vmatmul.mubr.f32.gmra.mrb[0].mxu0 %v177
  %v502 = vpop.f32.mrb[0].mxu0
  %v503 = vadd.f32 0.0, %v502
  %v504 = vpop.f32.mrb[0].mxu0
  %505 = vmatprep.mubr.f32.mxu0 0.0
  %506 = vmatmul.mubr.f32.gmra.mrb[0].mxu0 %v180
  %v507 = vpop.f32.mrb[0].mxu0
  %v508 = vadd.f32 0.0, %v507
  %v509 = vpop.f32.mrb[0].mxu0
  %510 = vmatprep.mubr.f32.mxu0 0.0
  %511 = vmatmul.mubr.f32.gmra.mrb[0].mxu0 %v183
  %v512 = vpop.f32.mrb[0].mxu0
  %v513 = vadd.f32 0.0, %v512
  %v514 = vpop.f32.mrb[0].mxu0
  %515 = vmatprep.mubr.f32.mxu0 0.0
  %516 = vmatmul.mubr.f32.gmra.mrb[0].mxu0 %v186
  %v517 = vpop.f32.mrb[0].mxu0
  %v518 = vadd.f32 0.0, %v517
  %v519 = vpop.f32.mrb[0].mxu0
  %520 = vmatprep.mubr.f32.mxu0 0.0
  %521 = vmatmul.mubr.f32.gmra.mrb[0].mxu0 %v189
  %v522 = vpop.f32.mrb[0].mxu0
  %v523 = vadd.f32 0.0, %v522
  %v524 = vpop.f32.mrb[0].mxu0
  %525 = vdwg.mxu0
  %v527 = vsel %vm65, %v414, 0
  %v530 = vsel %vm65, %v416, 0
  %v533 = vsel %vm65, %v418, 0
  %v536 = vsel %vm65, %v420, 0
  %538 = vmatprep.subr.mxu0 0.0
  %539 = vmatpush1.msra.mxu0 %v488
  %540 = vmatprep.subr.mxu0 0.0
  %541 = vmatpush1.msra.mxu0 %v493
  %542 = vmatprep.subr.mxu0 0.0
  %543 = vmatpush1.msra.mxu0 %v498
  %544 = vmatprep.subr.mxu0 0.0
  %545 = vmatpush1.msra.mxu0 %v503
  %546 = vmatprep.subr.mxu0 0.0
  %547 = vmatpush1.msra.mxu0 %v508
  %548 = vmatprep.subr.mxu0 0.0
  %549 = vmatpush1.msra.mxu0 %v513
  %550 = vmatprep.subr.mxu0 0.0
  %551 = vmatpush1.msra.mxu0 %v518
  %552 = vmatprep.subr.mxu0 0.0
  %553 = vmatpush1.msra.mxu0 %v523
  %554 = vmatprep.subr.mxu0 0.0
  %555 = vmatpush1.msra.mxu0 0.0
  %556 = vmatprep.subr.mxu0 0.0
  %557 = vmatpush1.msra.mxu0 0.0
  %558 = vmatprep.subr.mxu0 0.0
  %559 = vmatpush1.msra.mxu0 0.0
  %560 = vmatprep.subr.mxu0 0.0
  %561 = vmatpush1.msra.mxu0 0.0
  %562 = vmatprep.subr.mxu0 0.0
  %563 = vmatpush1.msra.mxu0 0.0
  %564 = vmatprep.subr.mxu0 0.0
  %565 = vmatpush1.msra.mxu0 0.0
  %566 = vmatprep.subr.mxu0 0.0
  %567 = vmatpush1.msra.mxu0 0.0
  %568 = vmatprep.subr.mxu0 0.0
  %569 = vmatpush1.msra.mxu0 0.0
  %570 = vmatprep.subr.mxu0 0.0
  %571 = vmatpush1.msra.mxu0 0.0
  %572 = vmatprep.subr.mxu0 0.0
  %573 = vmatpush1.msra.mxu0 0.0
  %574 = vmatprep.subr.mxu0 0.0
  %575 = vmatpush1.msra.mxu0 0.0
  %576 = vmatprep.subr.mxu0 0.0
  %577 = vmatpush1.msra.mxu0 0.0
  %578 = vmatprep.subr.mxu0 0.0
  %579 = vmatpush1.msra.mxu0 0.0
  %580 = vmatprep.subr.mxu0 0.0
  %581 = vmatpush1.msra.mxu0 0.0
  %582 = vmatprep.subr.mxu0 0.0
  %583 = vmatpush1.msra.mxu0 0.0
  %584 = vmatprep.subr.mxu0 0.0
  %585 = vmatpush1.msra.mxu0 0.0
  %586 = vmatprep.subr.mxu0 0.0
  %587 = vmatpush1.msra.mxu0 0.0
  %588 = vmatprep.subr.mxu0 0.0
  %589 = vmatpush1.msra.mxu0 0.0
  %590 = vmatprep.subr.mxu0 0.0
  %591 = vmatpush1.msra.mxu0 0.0
  %592 = vmatprep.subr.mxu0 0.0
  %593 = vmatpush1.msra.mxu0 0.0
  %594 = vmatprep.subr.mxu0 0.0
  %595 = vmatpush1.msra.mxu0 0.0
  %596 = vmatprep.subr.mxu0 0.0
  %597 = vmatpush1.msra.mxu0 0.0
  %598 = vmatprep.subr.mxu0 0.0
  %599 = vmatpush1.msra.mxu0 0.0
  %600 = vmatprep.subr.mxu0 0.0
  %601 = vmatpush1.msra.mxu0 0.0
  %602 = vmatprep.mubr.f32.mxu0 0.0
  %603 = vmatmul.mubr.f32.gmra.mrb[0].mxu0 %v527
  %v604 = vpop.f32.mrb[0].mxu0
  %v605 = vadd.f32 0.0, %v604
  %v606 = vpop.f32.mrb[0].mxu0
  %607 = vmatprep.mubr.f32.mxu0 0.0
  %608 = vmatmul.mubr.f32.gmra.mrb[0].mxu0 %v530
  %v609 = vpop.f32.mrb[0].mxu0
  %v610 = vadd.f32 0.0, %v609
  %v611 = vpop.f32.mrb[0].mxu0
  %612 = vmatprep.mubr.f32.mxu0 0.0
  %613 = vmatmul.mubr.f32.gmra.mrb[0].mxu0 %v533
  %v614 = vpop.f32.mrb[0].mxu0
  %v615 = vadd.f32 0.0, %v614
  %v616 = vpop.f32.mrb[0].mxu0
  %617 = vmatprep.mubr.f32.mxu0 0.0
  %618 = vmatmul.mubr.f32.gmra.mrb[0].mxu0 %v536
  %v619 = vpop.f32.mrb[0].mxu0
  %v620 = vadd.f32 0.0, %v619
  %v621 = vpop.f32.mrb[0].mxu0
  %622 = vdwg.mxu0
  %vm623 = vcmask 261120
  %v624 = vsel %vm623, %v605, 0.0
  %625 = vadd.xlane.f32.xlu0 %v624
  %v626 = vpop.xlane.xlu0 %625
  %v627 = vsel %vm623, %v610, 0.0
  %628 = vadd.xlane.f32.xlu0 %v627
  %v629 = vpop.xlane.xlu0 %628
  %v630 = vsel %vm623, %v615, 0.0
  %631 = vadd.xlane.f32.xlu0 %v630
  %v632 = vpop.xlane.xlu0 %631
  %v633 = vsel %vm623, %v620, 0.0
  %634 = vadd.xlane.f32.xlu0 %v633
  %v635 = vpop.xlane.xlu0 %634
  %v636 = vrcp.pop 32.0
  %v637 = vmul.f32 %v626, %v636
  %v638 = vmul.f32 %v629, %v636
  %v639 = vmul.f32 %v632, %v636
  %v640 = vmul.f32 %v635, %v636
  %v641 = vsub.f32 %v605, %v637
  %v642 = vsub.f32 %v610, %v638
  %v643 = vsub.f32 %v615, %v639
  %v644 = vsub.f32 %v620, %v640
  %v645 = vmul.f32 %v641, %v641
  %v646 = vmul.f32 %v642, %v642
  %v647 = vmul.f32 %v643, %v643
  %v648 = vmul.f32 %v644, %v644
  %v649 = vsel %vm623, %v645, 0.0
  %650 = vadd.xlane.f32.xlu0 %v649
  %v651 = vpop.xlane.xlu0 %650
  %v652 = vsel %vm623, %v646, 0.0
  %653 = vadd.xlane.f32.xlu0 %v652
  %v654 = vpop.xlane.xlu0 %653
  %v655 = vsel %vm623, %v647, 0.0
  %656 = vadd.xlane.f32.xlu0 %v655
  %v657 = vpop.xlane.xlu0 %656
  %v658 = vsel %vm623, %v648, 0.0
  %659 = vadd.xlane.f32.xlu0 %v658
  %v660 = vpop.xlane.xlu0 %659
  %v661 = vmul.f32 %v651, %v636
  %v662 = vmul.f32 %v654, %v636
  %v663 = vmul.f32 %v657, %v636
  %v664 = vmul.f32 %v660, %v636
  %v665 = vadd.f32 %v661, 1e-05
  %v666 = vadd.f32 %v662, 1e-05
  %v667 = vadd.f32 %v663, 1e-05
  %v668 = vadd.f32 %v664, 1e-05
  %v669 = vrsqrt.pop %v665
  %v670 = vrsqrt.pop %v666
  %v671 = vrsqrt.pop %v667
  %v672 = vrsqrt.pop %v668
  %v673 = vmul.f32 %v641, %v669
  %v674 = vmul.f32 %v642, %v670
  %v675 = vmul.f32 %v643, %v671
  %v676 = vmul.f32 %v644, %v672
  %v677 = vlaneseq
  %v678 = vshrl.u32 %v677, 7
  %v679 = vsub.s32 0, %v678
  %v680 = vrot.slane %v59, %v679
  %v681 = vmul.f32 %v673, %v680
  %v682 = vmul.f32 %v674, %v680
  %v683 = vmul.f32 %v675, %v680
  %v684 = vmul.f32 %v676, %v680
  %v685 = vlaneseq
  %v686 = vshrl.u32 %v685, 7
  %v687 = vsub.s32 1, %v686
  %v688 = vrot.slane %v59, %v687
  %v689 = vadd.f32 %v681, %v688
  %v690 = vadd.f32 %v682, %v688
  %v691 = vadd.f32 %v683, %v688
  %v692 = vadd.f32 %v684, %v688
  %v694 = vrot.slane %v59, 2
  %v695 = vsel %vm623, %v694, 0
  %697 = vmatprep.subr.mxu0 0.0
  %698 = vmatpush1.msra.mxu0 %v689
  %699 = vmatprep.subr.mxu0 0.0
  %700 = vmatpush1.msra.mxu0 %v690
  %701 = vmatprep.subr.mxu0 0.0
  %702 = vmatpush1.msra.mxu0 %v691
  %703 = vmatprep.subr.mxu0 0.0
  %704 = vmatpush1.msra.mxu0 %v692
  %705 = vmatprep.subr.mxu0 0.0
  %706 = vmatpush1.msra.mxu0 0.0
  %707 = vmatprep.subr.mxu0 0.0
  %708 = vmatpush1.msra.mxu0 0.0
  %709 = vmatprep.subr.mxu0 0.0
  %710 = vmatpush1.msra.mxu0 0.0
  %711 = vmatprep.subr.mxu0 0.0
  %712 = vmatpush1.msra.mxu0 0.0
  %713 = vmatprep.subr.mxu0 0.0
  %714 = vmatpush1.msra.mxu0 0.0
  %715 = vmatprep.subr.mxu0 0.0
  %716 = vmatpush1.msra.mxu0 0.0
  %717 = vmatprep.subr.mxu0 0.0
  %718 = vmatpush1.msra.mxu0 0.0
  %719 = vmatprep.subr.mxu0 0.0
  %720 = vmatpush1.msra.mxu0 0.0
  %721 = vmatprep.subr.mxu0 0.0
  %722 = vmatpush1.msra.mxu0 0.0
  %723 = vmatprep.subr.mxu0 0.0
  %724 = vmatpush1.msra.mxu0 0.0
  %725 = vmatprep.subr.mxu0 0.0
  %726 = vmatpush1.msra.mxu0 0.0
  %727 = vmatprep.subr.mxu0 0.0
  %728 = vmatpush1.msra.mxu0 0.0
  %729 = vmatprep.subr.mxu0 0.0
  %730 = vmatpush1.msra.mxu0 0.0
  %731 = vmatprep.subr.mxu0 0.0
  %732 = vmatpush1.msra.mxu0 0.0
  %733 = vmatprep.subr.mxu0 0.0
  %734 = vmatpush1.msra.mxu0 0.0
  %735 = vmatprep.subr.mxu0 0.0
  %736 = vmatpush1.msra.mxu0 0.0
  %737 = vmatprep.subr.mxu0 0.0
  %738 = vmatpush1.msra.mxu0 0.0
  %739 = vmatprep.subr.mxu0 0.0
  %740 = vmatpush1.msra.mxu0 0.0
  %741 = vmatprep.subr.mxu0 0.0
  %742 = vmatpush1.msra.mxu0 0.0
  %743 = vmatprep.subr.mxu0 0.0
  %744 = vmatpush1.msra.mxu0 0.0
  %745 = vmatprep.subr.mxu0 0.0
  %746 = vmatpush1.msra.mxu0 0.0
  %747 = vmatprep.subr.mxu0 0.0
  %748 = vmatpush1.msra.mxu0 0.0
  %749 = vmatprep.subr.mxu0 0.0
  %750 = vmatpush1.msra.mxu0 0.0
  %751 = vmatprep.subr.mxu0 0.0
  %752 = vmatpush1.msra.mxu0 0.0
  %753 = vmatprep.subr.mxu0 0.0
  %754 = vmatpush1.msra.mxu0 0.0
  %755 = vmatprep.subr.mxu0 0.0
  %756 = vmatpush1.msra.mxu0 0.0
  %757 = vmatprep.subr.mxu0 0.0
  %758 = vmatpush1.msra.mxu0 0.0
  %759 = vmatprep.subr.mxu0 0.0
  %760 = vmatpush1.msra.mxu0 0.0
  %761 = vmatprep.mubr.f32.mxu0 0.0
  %762 = vmatmul.mubr.f32.gmra.mrb[0].mxu0 %v695
  %v763 = vpop.f32.mrb[0].mxu0
  %v764 = vadd.f32 0.0, %v763
  %v765 = vpop.f32.mrb[0].mxu0
  %766 = vdwg.mxu0
  %v767 = vlaneseq
  %v768 = vshrl.u32 %v767, 7
  %v769 = vsub.s32 0, %v768
  %v770 = vrot.slane %v64, %v769
  %v772 = vsel %vm623, %v764, 0
  %774 = vmatprep.subr.mxu0 0.0
  %775 = vmatpush1.msra.mxu0 %v60
  %776 = vmatprep.subr.mxu0 0.0
  %777 = vmatpush1.msra.mxu0 %v61
  %778 = vmatprep.subr.mxu0 0.0
  %779 = vmatpush1.msra.mxu0 %v62
  %780 = vmatprep.subr.mxu0 0.0
  %781 = vmatpush1.msra.mxu0 %v63
  %782 = vmatprep.subr.mxu0 0.0
  %783 = vmatpush1.msra.mxu0 0.0
  %784 = vmatprep.subr.mxu0 0.0
  %785 = vmatpush1.msra.mxu0 0.0
  %786 = vmatprep.subr.mxu0 0.0
  %787 = vmatpush1.msra.mxu0 0.0
  %788 = vmatprep.subr.mxu0 0.0
  %789 = vmatpush1.msra.mxu0 0.0
  %790 = vmatprep.subr.mxu0 0.0
  %791 = vmatpush1.msra.mxu0 0.0
  %792 = vmatprep.subr.mxu0 0.0
  %793 = vmatpush1.msra.mxu0 0.0
  %794 = vmatprep.subr.mxu0 0.0
  %795 = vmatpush1.msra.mxu0 0.0
  %796 = vmatprep.subr.mxu0 0.0
  %797 = vmatpush1.msra.mxu0 0.0
  %798 = vmatprep.subr.mxu0 0.0
  %799 = vmatpush1.msra.mxu0 0.0
  %800 = vmatprep.subr.mxu0 0.0
  %801 = vmatpush1.msra.mxu0 0.0
  %802 = vmatprep.subr.mxu0 0.0
  %803 = vmatpush1.msra.mxu0 0.0
  %804 = vmatprep.subr.mxu0 0.0
  %805 = vmatpush1.msra.mxu0 0.0
  %806 = vmatprep.subr.mxu0 0.0
  %807 = vmatpush1.msra.mxu0 0.0
  %808 = vmatprep.subr.mxu0 0.0
  %809 = vmatpush1.msra.mxu0 0.0
  %810 = vmatprep.subr.mxu0 0.0
  %811 = vmatpush1.msra.mxu0 0.0
  %812 = vmatprep.subr.mxu0 0.0
  %813 = vmatpush1.msra.mxu0 0.0
  %814 = vmatprep.subr.mxu0 0.0
  %815 = vmatpush1.msra.mxu0 0.0
  %816 = vmatprep.subr.mxu0 0.0
  %817 = vmatpush1.msra.mxu0 0.0
  %818 = vmatprep.subr.mxu0 0.0
  %819 = vmatpush1.msra.mxu0 0.0
  %820 = vmatprep.subr.mxu0 0.0
  %821 = vmatpush1.msra.mxu0 0.0
  %822 = vmatprep.subr.mxu0 0.0
  %823 = vmatpush1.msra.mxu0 0.0
  %824 = vmatprep.subr.mxu0 0.0
  %825 = vmatpush1.msra.mxu0 0.0
  %826 = vmatprep.subr.mxu0 0.0
  %827 = vmatpush1.msra.mxu0 0.0
  %828 = vmatprep.subr.mxu0 0.0
  %829 = vmatpush1.msra.mxu0 0.0
  %830 = vmatprep.subr.mxu0 0.0
  %831 = vmatpush1.msra.mxu0 0.0
  %832 = vmatprep.subr.mxu0 0.0
  %833 = vmatpush1.msra.mxu0 0.0
  %834 = vmatprep.subr.mxu0 0.0
  %835 = vmatpush1.msra.mxu0 0.0
  %836 = vmatprep.subr.mxu0 0.0
  %837 = vmatpush1.msra.mxu0 0.0
  %838 = vmatprep.mubr.f32.mxu0 0.0
  %839 = vmatmul.mubr.f32.gmra.mrb[0].mxu0 %v772
  %v840 = vpop.f32.mrb[0].mxu0
  %v841 = vadd.f32 %v770, %v840
  %v842 = vpop.f32.mrb[0].mxu0
  %843 = vdwg.mxu0
  %844 = vst [vmem:[%s4] sm:$0x3] %v841
  // Predicated region
  $region18: #{attention_forward.1} parent=0 // pred_check
    _
  $region19: #{attention_forward.1} parent=0 // pred_check_branch
    %846 = sbr.rel (0) target = $region21
  $region20: #{attention_forward.1} parent=0 // pred_region
    _
  $region21: #{attention_forward.1} parent=0 // pred_fallthru
    _
  // Predicated region
  $region22: #{attention_forward.1} parent=0 // pred_check
    _
  $region23: #{attention_forward.1} parent=0 // pred_check_branch
    %848 = sbr.rel (0) target = $region25
  $region24: #{attention_forward.1} parent=0 // pred_region
    _
  $region25: #{attention_forward.1} parent=0 // pred_fallthru
    _

</llo_original>
